<compile_context>
chip_gen: v6e
topology: v6e:2x2x1
jax: 0.10.0
libtpu: 0.0.40
codegen_flags: <defaults>
</compile_context>

<pallas_src>
import math

import jax
import jax.numpy as jnp
from jax import lax
from jax.experimental import pallas as pl
from jax.experimental.pallas import tpu as pltpu

# RReLU eval-mode negative slope: (lower + upper) / 2 with PyTorch defaults.
_RRELU_SLOPE = (1.0 / 8.0 + 1.0 / 3.0) / 2.0

_TILE_B_DEFAULT = 4096  # rows per grid step; multiple of 8 (and of 128)


def _rrelu(h):
    # Single VPU vmax instead of cmp+select (valid because 0 < slope < 1).
    return jnp.maximum(h, h * _RRELU_SLOPE)


def _round_up(n, m):
    return ((n + m - 1) // m) * m


def dnn_kernel(x_ref, w1_ref, b1_ref, w2_ref, b2_ref, w3_ref, b3_ref, o_ref):
    # x tile arrives f32 straight from HBM; cast to bf16 for the MXU here.
    x = x_ref[...].astype(jnp.bfloat16)                      # (tile_b, 200)

    # Layer 1: (tile_b,200) @ (200,128) on the MXU, f32 accumulate; bias+RReLU
    # stay in f32 (native VPU on all generations).
    h = jnp.dot(x, w1_ref[...], preferred_element_type=jnp.float32) + b1_ref[...]
    h = _rrelu(h)
    # Dropout(0.3) -> identity in eval mode.

    # Layer 2: (tile_b,128) @ (128,32) on the MXU, f32 accumulate, +bias, RReLU.
    h = jnp.dot(h.astype(jnp.bfloat16), w2_ref[...],
                preferred_element_type=jnp.float32) + b2_ref[...]
    h = _rrelu(h)                                            # (tile_b, 32) f32
    # Dropout(0.3) -> identity in eval mode.

    # Layer 3 (N=1): produce the result lane-dense as a (1, tile_b) row via a
    # rhs-transposed dot (same pattern as q @ k^T): (1,32) . (tile_b,32)^T.
    row = lax.dot_general(w3_ref[...], h.astype(jnp.bfloat16),
                          (((1,), (1,)), ((), ())),
                          preferred_element_type=jnp.float32)   # (1, tile_b)
    row = _rrelu(row + b3_ref[...])
    o_ref[0] = row.astype(o_ref.dtype)                       # full-width store


def dnn_forward(x, params, *, tile_b=_TILE_B_DEFAULT):
    """x: (B, ...) -> flattened to (B, 200). Returns (B, 1) float32."""
    B = x.shape[0]
    x2d = x.reshape(B, -1)   # contiguous reshape: no HBM copy
    assert x2d.shape[1] == 200, f"expected 200 flattened features, got {x2d.shape[1]}"

    w1, b1, w2, b2, w3, b3 = params

    # Weights for the MXU in bf16 (tiny, one-time cast); x stays f32 and is
    # cast in-kernel.  Layer-3 weight as a (1, 32) bf16 row; bias as (1,1) f32.
    w1_bf16 = w1.astype(jnp.bfloat16)
    w2_bf16 = w2.astype(jnp.bfloat16)
    w3_row = w3.reshape(1, 32).astype(jnp.bfloat16)
    b3_2d = b3.reshape(1, 1).astype(jnp.float32)

    # Batch tiling: no padding copy; ragged tail handled by cdiv grid (the
    # unspecified tail rows of the output are sliced off below).
    tile_b = min(tile_b, _round_up(B, 8))
    num_tiles = pl.cdiv(B, tile_b)
    n_rows = num_tiles * tile_b

    resident = lambda a: pl.BlockSpec(a.shape, lambda i: (0,) * a.ndim)

    flops_per_row = 2 * (200 * 128 + 128 * 32 + 32)
    weight_bytes = (200 * 128 + 128 * 32 + 32) * 2 + (128 + 32 + 1) * 4
    cost = pl.CostEstimate(
        flops=flops_per_row * n_rows,
        transcendentals=0,
        bytes_accessed=n_rows * 200 * 4 + n_rows * 4 + weight_bytes,
    )

    out = pl.pallas_call(
        dnn_kernel,
        out_shape=jax.ShapeDtypeStruct((num_tiles, 1, tile_b), jnp.float32),
        grid=(num_tiles,),
        in_specs=[
            pl.BlockSpec((tile_b, 200), lambda i: (i, 0)),   # x streamed (f32)
            resident(w1_bf16),                               # weights stay in VMEM
            resident(b1),
            resident(w2_bf16),
            resident(b2),
            resident(w3_row),
            resident(b3_2d),
        ],
        out_specs=pl.BlockSpec((1, 1, tile_b), lambda i: (i, 0, 0)),  # lane-dense
        compiler_params=pltpu.CompilerParams(
            dimension_semantics=("parallel",),   # shard batch across TCs on v7x
            vmem_limit_bytes=48 * 1024 * 1024,   # room for big double-buffered x
        ),
        cost_estimate=cost,
    )(x2d, w1_bf16, b1, w2_bf16, b2, w3_row, b3_2d)

    # (num_tiles, 1, tile_b) lane-dense -> (B, 1); tail rows past B are
    # unspecified and discarded here (rows are independent, never reduced).
    return out.reshape(n_rows, 1)[:B]


def init_params(key):
    """Deterministic init mirroring nn.Linear defaults (uniform +/- 1/sqrt(fan_in))."""
    dims = [(200, 128), (128, 32), (32, 1)]
    params = []
    for (fan_in, fan_out) in dims:
        key, kw, kb = jax.random.split(key, 3)
        bound = 1.0 / math.sqrt(fan_in)
        w = jax.random.uniform(kw, (fan_in, fan_out), jnp.float32, -bound, bound)
        b = jax.random.uniform(kb, (1, fan_out), jnp.float32, -bound, bound)
        params += [w, b]
    return tuple(params)


if __name__ == "__main__":
    key = jax.random.PRNGKey(0)
    key, kx = jax.random.split(key)
    params = init_params(key)

    # Small input consistent with the module: batch=8, 200 features
    # (e.g. a (8, 10, 20) tensor flattened to (8, 200) by forward()).
    x = jax.random.normal(kx, (8, 10, 20), jnp.float32)

    out = dnn_forward(x, params)
    out = jax.block_until_ready(out)
    assert out.shape == (8, 1)

    # Reference with the same precision choices (bf16 matmul inputs, f32
    # accumulation, f32 bias/RReLU).
    w1, b1, w2, b2, w3, b3 = params
    xr = x.reshape(x.shape[0], -1)
    h = _rrelu(jnp.dot(xr.astype(jnp.bfloat16), w1.astype(jnp.bfloat16),
                       preferred_element_type=jnp.float32) + b1)
    h = _rrelu(jnp.dot(h.astype(jnp.bfloat16), w2.astype(jnp.bfloat16),
                       preferred_element_type=jnp.float32) + b2)
    ref = _rrelu(jnp.dot(h.astype(jnp.bfloat16), w3.astype(jnp.bfloat16),
                         preferred_element_type=jnp.float32) + b3)
    assert jnp.allclose(out, ref, atol=2e-3, rtol=2e-3), (
        f"max abs diff {jnp.max(jnp.abs(out - ref))}")

    # Sanity-check against the full-f32 reference with a loose tolerance
    # (bf16 matmul inputs change numerics slightly).
    h32 = _rrelu(xr @ w1 + b1)
    h32 = _rrelu(h32 @ w2 + b2)
    ref32 = _rrelu(h32 @ w3 + b3)
    assert jnp.allclose(out, ref32, atol=5e-2, rtol=5e-2)

    print("KERNEL_OK")
</pallas_src>

<mosaic_0001>
module attributes {stable_mosaic.version = 11 : i64} {
  func.func @dnn_kernel(%arg0: i32, %arg1: memref<8x200xf32, #tpu.memory_space<vmem>>, %arg2: memref<200x128xbf16, #tpu.memory_space<vmem>>, %arg3: memref<1x128xf32, #tpu.memory_space<vmem>>, %arg4: memref<128x32xbf16, #tpu.memory_space<vmem>>, %arg5: memref<1x32xf32, #tpu.memory_space<vmem>>, %arg6: memref<1x32xbf16, #tpu.memory_space<vmem>>, %arg7: memref<1x1xf32, #tpu.memory_space<vmem>>, %arg8: memref<1x1x8xf32, #tpu.memory_space<vmem>>) attributes {dimension_semantics = [#tpu.dimension_semantics<parallel>], iteration_bounds = array<i64: 1>, scalar_prefetch = 0 : i64, scratch_operands = 0 : i64, tpu.core_type = #tpu.core_type<tc>, window_params = [{transform_indices = @transform_0, window_bounds = array<i64: 8, 200>}, {pipeline_mode = #tpu.pipeline_mode<synchronous>, transform_indices = @transform_1, window_bounds = array<i64: 200, 128>}, {pipeline_mode = #tpu.pipeline_mode<synchronous>, transform_indices = @transform_2, window_bounds = array<i64: 1, 128>}, {pipeline_mode = #tpu.pipeline_mode<synchronous>, transform_indices = @transform_3, window_bounds = array<i64: 128, 32>}, {pipeline_mode = #tpu.pipeline_mode<synchronous>, transform_indices = @transform_4, window_bounds = array<i64: 1, 32>}, {pipeline_mode = #tpu.pipeline_mode<synchronous>, transform_indices = @transform_5, window_bounds = array<i64: 1, 32>}, {pipeline_mode = #tpu.pipeline_mode<synchronous>, transform_indices = @transform_6, window_bounds = array<i64: 1, 1>}, {transform_indices = @transform_7, window_bounds = array<i64: 1, 1, 8>}]} {
    %c0 = arith.constant 0 : index
    %c0_0 = arith.constant 0 : index
    %0 = vector.load %arg1[%c0, %c0_0] : memref<8x200xf32, #tpu.memory_space<vmem>>, vector<8x200xf32>
    %1 = arith.truncf %0 : vector<8x200xf32> to vector<8x200xbf16>
    %c0_1 = arith.constant 0 : index
    %c0_2 = arith.constant 0 : index
    %2 = vector.load %arg2[%c0_1, %c0_2] : memref<200x128xbf16, #tpu.memory_space<vmem>>, vector<200x128xbf16>
    %cst = arith.constant dense<0.000000e+00> : vector<8x128xf32>
    %3 = tpu.matmul %1, %2, %cst {dimension_numbers = #tpu.dot_dimension_numbers<[1], [0], [0], [1], [0, 0, 1, 1], [], []>} : vector<8x200xbf16>, vector<200x128xbf16>, vector<8x128xf32> -> vector<8x128xf32>
    %c0_3 = arith.constant 0 : index
    %c0_4 = arith.constant 0 : index
    %4 = vector.load %arg3[%c0_3, %c0_4] : memref<1x128xf32, #tpu.memory_space<vmem>>, vector<1x128xf32>
    %5 = vector.broadcast %4 : vector<1x128xf32> to vector<8x128xf32>
    %6 = arith.addf %3, %5 : vector<8x128xf32>
    %cst_5 = arith.constant 0.229166672 : f32
    %7 = vector.broadcast %cst_5 : f32 to vector<8x128xf32>
    %8 = arith.mulf %6, %7 : vector<8x128xf32>
    %9 = arith.maximumf %6, %8 : vector<8x128xf32>
    %10 = arith.truncf %9 : vector<8x128xf32> to vector<8x128xbf16>
    %c0_6 = arith.constant 0 : index
    %c0_7 = arith.constant 0 : index
    %11 = vector.load %arg4[%c0_6, %c0_7] : memref<128x32xbf16, #tpu.memory_space<vmem>>, vector<128x32xbf16>
    %cst_8 = arith.constant dense<0.000000e+00> : vector<8x32xf32>
    %12 = tpu.matmul %10, %11, %cst_8 {dimension_numbers = #tpu.dot_dimension_numbers<[1], [0], [0], [1], [0, 0, 1, 1], [], []>} : vector<8x128xbf16>, vector<128x32xbf16>, vector<8x32xf32> -> vector<8x32xf32>
    %c0_9 = arith.constant 0 : index
    %c0_10 = arith.constant 0 : index
    %13 = vector.load %arg5[%c0_9, %c0_10] : memref<1x32xf32, #tpu.memory_space<vmem>>, vector<1x32xf32>
    %14 = vector.broadcast %13 : vector<1x32xf32> to vector<8x32xf32>
    %15 = arith.addf %12, %14 : vector<8x32xf32>
    %cst_11 = arith.constant 0.229166672 : f32
    %16 = vector.broadcast %cst_11 : f32 to vector<8x32xf32>
    %17 = arith.mulf %15, %16 : vector<8x32xf32>
    %18 = arith.maximumf %15, %17 : vector<8x32xf32>
    %c0_12 = arith.constant 0 : index
    %c0_13 = arith.constant 0 : index
    %19 = vector.load %arg6[%c0_12, %c0_13] : memref<1x32xbf16, #tpu.memory_space<vmem>>, vector<1x32xbf16>
    %20 = arith.truncf %18 : vector<8x32xf32> to vector<8x32xbf16>
    %cst_14 = arith.constant dense<0.000000e+00> : vector<1x8xf32>
    %21 = tpu.matmul %19, %20, %cst_14 {dimension_numbers = #tpu.dot_dimension_numbers<[1], [1], [0], [0], [0, 0, 1, 0], [], []>} : vector<1x32xbf16>, vector<8x32xbf16>, vector<1x8xf32> -> vector<1x8xf32>
    %c0_15 = arith.constant 0 : index
    %c0_16 = arith.constant 0 : index
    %22 = vector.load %arg7[%c0_15, %c0_16] : memref<1x1xf32, #tpu.memory_space<vmem>>, vector<1x1xf32>
    %23 = vector.broadcast %22 : vector<1x1xf32> to vector<1x8xf32>
    %24 = arith.addf %21, %23 : vector<1x8xf32>
    %cst_17 = arith.constant 0.229166672 : f32
    %25 = vector.broadcast %cst_17 : f32 to vector<1x8xf32>
    %26 = arith.mulf %24, %25 : vector<1x8xf32>
    %27 = arith.maximumf %24, %26 : vector<1x8xf32>
    %c0_18 = arith.constant 0 : index
    %c0_19 = arith.constant 0 : index
    %c0_20 = arith.constant 0 : index
    %28 = vector.load %arg8[%c0_18, %c0_19, %c0_20] : memref<1x1x8xf32, #tpu.memory_space<vmem>>, vector<1x1x8xf32>
    %29 = vector.shape_cast %28 : vector<1x1x8xf32> to vector<1x8xf32>
    %30 = vector.shape_cast %27 : vector<1x8xf32> to vector<1x1x8xf32>
    tpu.vector_store %arg8[%c0_18, %c0_19, %c0_20], %30 {strides = array<i32>} : memref<1x1x8xf32, #tpu.memory_space<vmem>>, vector<1x1x8xf32>,
    return
  }
  func.func @transform_0(%arg0: i32) -> (i32, i32) {
    %c0_i32 = arith.constant 0 : i32
    %c0_i32_0 = arith.constant 0 : i32
    return %arg0, %c0_i32 : i32, i32
  }
  func.func @transform_1(%arg0: i32) -> (i32, i32) {
    %c0_i32 = arith.constant 0 : i32
    %c0_i32_0 = arith.constant 0 : i32
    %c0_i32_1 = arith.constant 0 : i32
    return %c0_i32, %c0_i32_0 : i32, i32
  }
  func.func @transform_2(%arg0: i32) -> (i32, i32) {
    %c0_i32 = arith.constant 0 : i32
    %c0_i32_0 = arith.constant 0 : i32
    %c0_i32_1 = arith.constant 0 : i32
    return %c0_i32, %c0_i32_0 : i32, i32
  }
  func.func @transform_3(%arg0: i32) -> (i32, i32) {
    %c0_i32 = arith.constant 0 : i32
    %c0_i32_0 = arith.constant 0 : i32
    %c0_i32_1 = arith.constant 0 : i32
    return %c0_i32, %c0_i32_0 : i32, i32
  }
  func.func @transform_4(%arg0: i32) -> (i32, i32) {
    %c0_i32 = arith.constant 0 : i32
    %c0_i32_0 = arith.constant 0 : i32
    %c0_i32_1 = arith.constant 0 : i32
    return %c0_i32, %c0_i32_0 : i32, i32
  }
  func.func @transform_5(%arg0: i32) -> (i32, i32) {
    %c0_i32 = arith.constant 0 : i32
    %c0_i32_0 = arith.constant 0 : i32
    %c0_i32_1 = arith.constant 0 : i32
    return %c0_i32, %c0_i32_0 : i32, i32
  }
  func.func @transform_6(%arg0: i32) -> (i32, i32) {
    %c0_i32 = arith.constant 0 : i32
    %c0_i32_0 = arith.constant 0 : i32
    %c0_i32_1 = arith.constant 0 : i32
    return %c0_i32, %c0_i32_0 : i32, i32
  }
  func.func @transform_7(%arg0: i32) -> (i32, i32, i32) {
    %c0_i32 = arith.constant 0 : i32
    %c0_i32_0 = arith.constant 0 : i32
    %c0_i32_1 = arith.constant 0 : i32
    return %arg0, %c0_i32, %c0_i32_0 : i32, i32, i32
  }
}

</mosaic_0001>

<llo_original>
// kernel: tpu_custom_call.1
$region0: #{tpu_custom_call.1}
  #allocation0 [shape = 'u32[]', space=smem, size = 0x4, offset = 0x4, fixed_abs, tag = 'smem constant byte address 0x4 - core index']
  #allocation1 [shape = 'u32[144,128]{1,0:T(1,128)}', space=vmem, size = 0x12000, scoped, tag = 'internal scratch']
  #allocation2 [shape = 'f32[1,1]{1,0:T(1,128)S(1)}', space=vmem, size = 0x200, scoped, tag = 'scoped memory for tpu_custom_call.1']
  %s0 = inlined_call_operand.vmem [shape: f32[8,200], index: 0, kind: input, shape index: {}]
  %s1 = inlined_call_operand.hbm [shape: bf16[200,128], index: 1, kind: input, shape index: {}]
  %s2 = inlined_call_operand.vmem [shape: f32[1,128], index: 2, kind: input, shape index: {}]
  %s3 = inlined_call_operand.vmem [shape: bf16[128,32], index: 3, kind: input, shape index: {}]
  %s4 = inlined_call_operand.vmem [shape: f32[1,32], index: 4, kind: input, shape index: {}]
  %s5 = inlined_call_operand.vmem [shape: bf16[1,32], index: 5, kind: input, shape index: {}]
  %s6 = inlined_call_operand.<no memory space> [shape: f32[1,1], index: 6, kind: input, shape index: {}]
  %s7 = inlined_call_operand.hbm [shape: f32[1,1,8], index: 7, kind: output, shape index: {}]
  %s8 = sld [smem:[#allocation0]]
  $region42: #{tpu_custom_call.1} parent=0
    _
  %s10 = ssub.s32 1, %s8
  %s11 = scalar_select 0, %s10, %s8
  %v12 = vstv %s6
  %13 = vst [vmem:[#allocation2] sm:$0x1] %v12
  $region1: #{tpu_custom_call.1} parent=0
    #allocation3 [shape = 'u8[51200]{0}', space=vmem, size = 0xc800, scoped, tag = 'input window, operand 1, single buffered']
    #allocation4 [shape = 's32[1]{0}', space=sflag, size = 0x4, scoped, tag = 'scoped memory for tpu_custom_call.1']
    #allocation5 [shape = 's32[1]{0}', space=sflag, size = 0x4, scoped, tag = 'scoped memory for tpu_custom_call.1']
    #allocation6 [shape = 'u8[512]{0}', space=vmem, size = 0x400, scoped, tag = 'output window, operand 0, single buffered']
    %14 = vsyncpa [#allocation4], 0
    %15 = vsyncpa [#allocation5], 0
    // Predicated region
    $region2: #{tpu_custom_call.1} parent=1 // pred_check
      _
    $region3: #{tpu_custom_call.1} parent=1 // pred_check_branch
      %17 = sbr.rel (0) target = $region5
    $region4: #{tpu_custom_call.1} parent=1 // pred_region
      _
    $region5: #{tpu_custom_call.1} parent=1 // pred_fallthru
      _
    // Predicated region
    $region6: #{tpu_custom_call.1} parent=1 // pred_check
      _
    $region7: #{tpu_custom_call.1} parent=1 // pred_check_branch
      %19 = sbr.rel (0) target = $region9
    $region8: #{tpu_custom_call.1} parent=1 // pred_region
      %s21 = ssub.s32 1600, 1600
      %22 = vsyncadd [#allocation4], %s21
      %s23 = sshll.u32 [#allocation3], 4
      %s24 = int_to_ptr.vmem [resolvable:$true] %s23
      %29 = dma.hbm_to_vmem [thread:$0]  %s1, 1600, %s24, [#allocation4], 64, 64, 4
    $region9: #{tpu_custom_call.1} parent=1 // pred_fallthru
      _
    // Predicated region
    $region10: #{tpu_custom_call.1} parent=1 // pred_check
      _
    $region11: #{tpu_custom_call.1} parent=1 // pred_check_branch
      %31 = sbr.rel (0) target = $region13
    $region12: #{tpu_custom_call.1} parent=1 // pred_region
      _
    $region13: #{tpu_custom_call.1} parent=1 // pred_fallthru
      _
    // Predicated region
    $region14: #{tpu_custom_call.1} parent=1 // pred_check
      _
    $region15: #{tpu_custom_call.1} parent=1 // pred_check_branch
      %33 = sbr.rel (0) target = $region17
    $region16: #{tpu_custom_call.1} parent=1 // pred_region
      _
    $region17: #{tpu_custom_call.1} parent=1 // pred_fallthru
      _
    // Predicated region
    $region18: #{tpu_custom_call.1} parent=1 // pred_check
      _
    $region19: #{tpu_custom_call.1} parent=1 // pred_check_branch
      %35 = sbr.rel (0) target = $region21
    $region20: #{tpu_custom_call.1} parent=1 // pred_region
      _
    $region21: #{tpu_custom_call.1} parent=1 // pred_fallthru
      _
    // Predicated region
    $region22: #{tpu_custom_call.1} parent=1 // pred_check
      _
    $region23: #{tpu_custom_call.1} parent=1 // pred_check_branch
      %37 = sbr.rel (0) target = $region25
    $region24: #{tpu_custom_call.1} parent=1 // pred_region
      _
    $region25: #{tpu_custom_call.1} parent=1 // pred_fallthru
      _
    // Predicated region
    $region26: #{tpu_custom_call.1} parent=1 // pred_check
      _
    $region27: #{tpu_custom_call.1} parent=1 // pred_check_branch
      %39 = sbr.rel (0) target = $region29
    $region28: #{tpu_custom_call.1} parent=1 // pred_region
      _
    $region29: #{tpu_custom_call.1} parent=1 // pred_fallthru
      _
    // Predicated region
    $region30: #{tpu_custom_call.1} parent=1 // pred_check
      _
    $region31: #{tpu_custom_call.1} parent=1 // pred_check_branch
      %41 = sbr.rel (0) target = $region33
    $region32: #{tpu_custom_call.1} parent=1 // pred_region
      %42 = dma.done [#allocation4], 1600
    $region33: #{tpu_custom_call.1} parent=1 // pred_fallthru
      _
    %v44 = vld [vmem:[%s0] sm:$0xff]
    %v45 = vld [vmem:[%s0 + $0x8] sm:$0xff]
    %v46 = vpack.c.bf16 %v44, %v44
    %v47 = vpack.c.bf16 %v45, %v45
    %v48 = vld [vmem:[#allocation3] sm:$0xf]
    %v49 = vld [vmem:[#allocation3 + $0x4] sm:$0xf]
    %v50 = vld [vmem:[#allocation3 + $0x8] sm:$0xf]
    %v51 = vld [vmem:[#allocation3 + $0xc] sm:$0xf]
    %v52 = vld [vmem:[#allocation3 + $0x10] sm:$0xf]
    %v53 = vld [vmem:[#allocation3 + $0x14] sm:$0xf]
    %v54 = vld [vmem:[#allocation3 + $0x18] sm:$0xf]
    %v55 = vld [vmem:[#allocation3 + $0x1c] sm:$0xf]
    %v56 = vld [vmem:[#allocation3 + $0x20] sm:$0xf]
    %v57 = vld [vmem:[#allocation3 + $0x24] sm:$0xf]
    %v58 = vld [vmem:[#allocation3 + $0x28] sm:$0xf]
    %v59 = vld [vmem:[#allocation3 + $0x2c] sm:$0xf]
    %v60 = vld [vmem:[#allocation3 + $0x30] sm:$0xf]
    %v61 = vld [vmem:[#allocation3 + $0x34] sm:$0xf]
    %v62 = vld [vmem:[#allocation3 + $0x38] sm:$0xf]
    %v63 = vld [vmem:[#allocation3 + $0x3c] sm:$0xf]
    %v64 = vld [vmem:[#allocation3 + $0x40] sm:$0xf]
    %v65 = vld [vmem:[#allocation3 + $0x44] sm:$0xf]
    %v66 = vld [vmem:[#allocation3 + $0x48] sm:$0xf]
    %v67 = vld [vmem:[#allocation3 + $0x4c] sm:$0xf]
    %v68 = vld [vmem:[#allocation3 + $0x50] sm:$0xf]
    %v69 = vld [vmem:[#allocation3 + $0x54] sm:$0xf]
    %v70 = vld [vmem:[#allocation3 + $0x58] sm:$0xf]
    %v71 = vld [vmem:[#allocation3 + $0x5c] sm:$0xf]
    %v72 = vld [vmem:[#allocation3 + $0x60] sm:$0xf]
    %v73 = vld [vmem:[%s2] sm:$0x1]
    %v75 = vlaneseq
    %v76 = vshrl.u32 %v75, 7
    %v77 = vsub.s32 0, %v76
    %v78 = vrot.slane %v73, %v77
    %v105 = vunpack.c.l.b16 %v48
    %v106 = vunpack.c.l.b16 %v49
    %v107 = vunpack.c.l.b16 %v50
    %v108 = vunpack.c.l.b16 %v51
    %v109 = vunpack.c.l.b16 %v52
    %v110 = vunpack.c.l.b16 %v53
    %v111 = vunpack.c.l.b16 %v54
    %v112 = vunpack.c.l.b16 %v55
    %v113 = vunpack.c.l.b16 %v56
    %v114 = vunpack.c.l.b16 %v57
    %v115 = vunpack.c.l.b16 %v58
    %v116 = vunpack.c.l.b16 %v59
    %v117 = vunpack.c.l.b16 %v60
    %v118 = vunpack.c.l.b16 %v61
    %v119 = vunpack.c.l.b16 %v62
    %v120 = vunpack.c.l.b16 %v63
    %v121 = vunpack.c.l.b16 %v64
    %v122 = vunpack.c.l.b16 %v65
    %v123 = vunpack.c.l.b16 %v66
    %v124 = vunpack.c.l.b16 %v67
    %v125 = vunpack.c.l.b16 %v68
    %v126 = vunpack.c.l.b16 %v69
    %v127 = vunpack.c.l.b16 %v70
    %v128 = vunpack.c.l.b16 %v71
    %v129 = vunpack.c.l.b16 %v72
    %v130 = vpack.c.b16 %v106, %v105
    %v131 = vpack.c.b16 %v108, %v107
    %v132 = vpack.c.b16 %v110, %v109
    %v133 = vpack.c.b16 %v112, %v111
    %v134 = vpack.c.b16 %v114, %v113
    %v135 = vpack.c.b16 %v116, %v115
    %v136 = vpack.c.b16 %v118, %v117
    %v137 = vpack.c.b16 %v120, %v119
    %v138 = vpack.c.b16 %v122, %v121
    %v139 = vpack.c.b16 %v124, %v123
    %v140 = vpack.c.b16 %v126, %v125
    %v141 = vpack.c.b16 %v128, %v127
    %v142 = vpack.c.b16 %v129, %v129
    %vm155 = vcmask 588800
    %v157 = vsel %vm155, %v47, 0
    %vm159 = vcmask 1043456
    %v161 = vsel %vm159, %v142, 0
    %163 = vmatprep.subr.bf16.mxu0 0
    %164 = vmatpush1.bf16.msra.mxu0 %v137
    %165 = vmatprep.subr.bf16.mxu0 0
    %166 = vmatpush1.bf16.msra.mxu0 %v136
    %167 = vmatprep.subr.bf16.mxu0 0
    %168 = vmatpush1.bf16.msra.mxu0 %v135
    %169 = vmatprep.subr.bf16.mxu0 0
    %170 = vmatpush1.bf16.msra.mxu0 %v134
    %171 = vmatprep.subr.bf16.mxu0 0
    %172 = vmatpush1.bf16.msra.mxu0 %v133
    %173 = vmatprep.subr.bf16.mxu0 0
    %174 = vmatpush1.bf16.msra.mxu0 %v132
    %175 = vmatprep.subr.bf16.mxu0 0
    %176 = vmatpush1.bf16.msra.mxu0 %v131
    %177 = vmatprep.subr.bf16.mxu0 0
    %178 = vmatpush1.bf16.msra.mxu0 %v130
    %179 = vmatprep.subr.bf16.mxu0 0
    %180 = vmatpush2.bf16.msra.mxu0 0
    %181 = vmatprep.subr.bf16.mxu0 0
    %182 = vmatpush2.bf16.msra.mxu0 0
    %183 = vmatprep.subr.bf16.mxu0 0
    %184 = vmatpush2.bf16.msra.mxu0 0
    %185 = vmatprep.subr.bf16.mxu0 0
    %186 = vmatpush2.bf16.msra.mxu0 %v161
    %187 = vmatprep.subr.bf16.mxu0 0
    %188 = vmatpush2.bf16.msra.mxu0 %v141
    %189 = vmatprep.subr.bf16.mxu0 0
    %190 = vmatpush2.bf16.msra.mxu0 %v140
    %191 = vmatprep.subr.bf16.mxu0 0
    %192 = vmatpush2.bf16.msra.mxu0 %v139
    %193 = vmatprep.subr.bf16.mxu0 0
    %194 = vmatpush2.bf16.msra.mxu0 %v138
    %195 = vmatprep.mubr.bf16.mxu0 %v157
    %196 = vmatmul.mubr.bf16.gmra.mxu0 %v46
    %v197 = vpop.f32.mrf.mxu0
    %v198 = vadd.f32 %v78, %v197
    %v199 = vpop.f32.mrf.mxu0
    %v200 = vpop.f32.mrf.mxu0
    %v201 = vpop.f32.mrf.mxu0
    %202 = vdwg.mxu0
    %v203 = vmul.f32 %v198, 0.22916667
    %v204 = vmax.f32 %v198, %v203
    %v205 = vpack.c.bf16 %v204, %v204
    %v206 = vld [vmem:[%s3] sm:$0xf]
    %v207 = vld [vmem:[%s3 + $0x4] sm:$0xf]
    %v208 = vld [vmem:[%s3 + $0x8] sm:$0xf]
    %v209 = vld [vmem:[%s3 + $0xc] sm:$0xf]
    %v210 = vld [vmem:[%s3 + $0x10] sm:$0xf]
    %v211 = vld [vmem:[%s3 + $0x14] sm:$0xf]
    %v212 = vld [vmem:[%s3 + $0x18] sm:$0xf]
    %v213 = vld [vmem:[%s3 + $0x1c] sm:$0xf]
    %v214 = vld [vmem:[%s3 + $0x20] sm:$0xf]
    %v215 = vld [vmem:[%s3 + $0x24] sm:$0xf]
    %v216 = vld [vmem:[%s3 + $0x28] sm:$0xf]
    %v217 = vld [vmem:[%s3 + $0x2c] sm:$0xf]
    %v218 = vld [vmem:[%s3 + $0x30] sm:$0xf]
    %v219 = vld [vmem:[%s3 + $0x34] sm:$0xf]
    %v220 = vld [vmem:[%s3 + $0x38] sm:$0xf]
    %v221 = vld [vmem:[%s3 + $0x3c] sm:$0xf]
    %v222 = vld [vmem:[%s4] sm:$0x1]
    %v224 = vlaneseq
    %v225 = vshrl.u32 %v224, 7
    %v226 = vsub.s32 0, %v225
    %v227 = vrot.slane %v222, %v226
    %v245 = vunpack.c.l.b16 %v206
    %v246 = vunpack.c.l.b16 %v207
    %v247 = vunpack.c.l.b16 %v208
    %v248 = vunpack.c.l.b16 %v209
    %v249 = vunpack.c.l.b16 %v210
    %v250 = vunpack.c.l.b16 %v211
    %v251 = vunpack.c.l.b16 %v212
    %v252 = vunpack.c.l.b16 %v213
    %v253 = vunpack.c.l.b16 %v214
    %v254 = vunpack.c.l.b16 %v215
    %v255 = vunpack.c.l.b16 %v216
    %v256 = vunpack.c.l.b16 %v217
    %v257 = vunpack.c.l.b16 %v218
    %v258 = vunpack.c.l.b16 %v219
    %v259 = vunpack.c.l.b16 %v220
    %v260 = vunpack.c.l.b16 %v221
    %v261 = vpack.c.b16 %v246, %v245
    %v262 = vpack.c.b16 %v248, %v247
    %v263 = vpack.c.b16 %v250, %v249
    %v264 = vpack.c.b16 %v252, %v251
    %v265 = vpack.c.b16 %v254, %v253
    %v266 = vpack.c.b16 %v256, %v255
    %v267 = vpack.c.b16 %v258, %v257
    %v268 = vpack.c.b16 %v260, %v259
    %277 = vmatprep.subr.bf16.mxu0 0
    %278 = vmatpush1.bf16.msra.mxu0 %v268
    %279 = vmatprep.subr.bf16.mxu0 0
    %280 = vmatpush1.bf16.msra.mxu0 %v267
    %281 = vmatprep.subr.bf16.mxu0 0
    %282 = vmatpush1.bf16.msra.mxu0 %v266
    %283 = vmatprep.subr.bf16.mxu0 0
    %284 = vmatpush1.bf16.msra.mxu0 %v265
    %285 = vmatprep.subr.bf16.mxu0 0
    %286 = vmatpush1.bf16.msra.mxu0 %v264
    %287 = vmatprep.subr.bf16.mxu0 0
    %288 = vmatpush1.bf16.msra.mxu0 %v263
    %289 = vmatprep.subr.bf16.mxu0 0
    %290 = vmatpush1.bf16.msra.mxu0 %v262
    %291 = vmatprep.subr.bf16.mxu0 0
    %292 = vmatpush1.bf16.msra.mxu0 %v261
    %293 = vmatprep.subr.bf16.mxu0 0
    %294 = vmatpush2.bf16.msra.mxu0 0
    %295 = vmatprep.subr.bf16.mxu0 0
    %296 = vmatpush2.bf16.msra.mxu0 0
    %297 = vmatprep.subr.bf16.mxu0 0
    %298 = vmatpush2.bf16.msra.mxu0 0
    %299 = vmatprep.subr.bf16.mxu0 0
    %300 = vmatpush2.bf16.msra.mxu0 0
    %301 = vmatprep.subr.bf16.mxu0 0
    %302 = vmatpush2.bf16.msra.mxu0 0
    %303 = vmatprep.subr.bf16.mxu0 0
    %304 = vmatpush2.bf16.msra.mxu0 0
    %305 = vmatprep.subr.bf16.mxu0 0
    %306 = vmatpush2.bf16.msra.mxu0 0
    %307 = vmatprep.subr.bf16.mxu0 0
    %308 = vmatpush2.bf16.msra.mxu0 0
    %309 = vmatprep.mubr.bf16.mxu0 0
    %310 = vmatmul.mubr.bf16.gmra.mxu0 %v205
    %v311 = vpop.f32.mrf.mxu0
    %v312 = vadd.f32 %v227, %v311
    %v313 = vpop.f32.mrf.mxu0
    %v314 = vpop.f32.mrf.mxu0
    %v315 = vpop.f32.mrf.mxu0
    %316 = vdwg.mxu0
    %v317 = vmul.f32 %v312, 0.22916667
    %v318 = vmax.f32 %v312, %v317
    %v319 = vld [vmem:[%s5] sm:$0x1]
    %v320 = vpack.c.bf16 %v318, %v318
    %v321 = vld [vmem:[#allocation2] sm:$0x1]
    %323 = vset.pattern.permute.xlu0 0
    %324 = vperm.xlu0 %323, %v321
    %v325 = vpop.permute.xlu0 %324
    %v327 = vlaneseq
    %v328 = vshrl.u32 %v327, 7
    %v329 = vsub.s32 0, %v328
    %v330 = vrot.slane %v325, %v329
    %vm331 = vcmask 261120
    %v333 = vsel %vm331, %v319, 0
    %v336 = vsel %vm331, %v320, 0
    %338 = vmatprep.subr.bf16.mxu0 0
    %339 = vmatpush1.bf16.xpose.msra.mxu0 0
    %340 = vmatprep.subr.bf16.mxu0 0
    %341 = vmatpush1.bf16.xpose.msra.mxu0 0
    %342 = vmatprep.subr.bf16.mxu0 0
    %343 = vmatpush1.bf16.xpose.msra.mxu0 0
    %344 = vmatprep.subr.bf16.mxu0 0
    %345 = vmatpush1.bf16.xpose.msra.mxu0 0
    %346 = vmatprep.subr.bf16.mxu0 0
    %347 = vmatpush1.bf16.xpose.msra.mxu0 0
    %348 = vmatprep.subr.bf16.mxu0 0
    %349 = vmatpush1.bf16.xpose.msra.mxu0 0
    %350 = vmatprep.subr.bf16.mxu0 0
    %351 = vmatpush1.bf16.xpose.msra.mxu0 0
    %352 = vmatprep.subr.bf16.mxu0 0
    %353 = vmatpush1.bf16.xpose.msra.mxu0 %v336
    %354 = vmatprep.subr.bf16.mxu0 0
    %355 = vmatpush2.bf16.xpose.msra.mxu0 0
    %356 = vmatprep.subr.bf16.mxu0 0
    %357 = vmatpush2.bf16.xpose.msra.mxu0 0
    %358 = vmatprep.subr.bf16.mxu0 0
    %359 = vmatpush2.bf16.xpose.msra.mxu0 0
    %360 = vmatprep.subr.bf16.mxu0 0
    %361 = vmatpush2.bf16.xpose.msra.mxu0 0
    %362 = vmatprep.subr.bf16.mxu0 0
    %363 = vmatpush2.bf16.xpose.msra.mxu0 0
    %364 = vmatprep.subr.bf16.mxu0 0
    %365 = vmatpush2.bf16.xpose.msra.mxu0 0
    %366 = vmatprep.subr.bf16.mxu0 0
    %367 = vmatpush2.bf16.xpose.msra.mxu0 0
    %368 = vmatprep.subr.bf16.mxu0 0
    %369 = vmatpush2.bf16.xpose.msra.mxu0 0
    %370 = vmatprep.mubr.bf16.mxu0 0
    %371 = vmatmul.mubr.bf16.gmra.mxu0 %v333
    %v372 = vpop.f32.mrf.mxu0
    %v373 = vadd.f32 %v330, %v372
    %v374 = vpop.f32.mrf.mxu0
    %v375 = vpop.f32.mrf.mxu0
    %v376 = vpop.f32.mrf.mxu0
    %377 = vdwg.mxu0
    %v378 = vmul.f32 %v373, 0.22916667
    %v379 = vmax.f32 %v373, %v378
    %vm380 = vcmask 57344
    %381 = vst.msk [vmem:[#allocation6] sm:$0x1] %vm380, %v379
    // Predicated region
    $region34: #{tpu_custom_call.1} parent=1 // pred_check
      _
    $region35: #{tpu_custom_call.1} parent=1 // pred_check_branch
      %383 = sbr.rel (0) target = $region37
    $region36: #{tpu_custom_call.1} parent=1 // pred_region
      %s385 = ssub.s32 16, 16
      %386 = vsyncadd [#allocation5], %s385
      %s388 = sshll.u32 [#allocation6], 4
      %s389 = int_to_ptr.vmem [resolvable:$true] %s388
      %391 = dma.vmem_to_hbm [thread:$0]  %s389, 16, %s7, [#allocation5]
    $region37: #{tpu_custom_call.1} parent=1 // pred_fallthru
      _
    // Predicated region
    $region38: #{tpu_custom_call.1} parent=1 // pred_check
      _
    $region39: #{tpu_custom_call.1} parent=1 // pred_check_branch
      %393 = sbr.rel (0) target = $region41
    $region40: #{tpu_custom_call.1} parent=1 // pred_region
      %394 = dma.done [#allocation5], 16
    $region41: #{tpu_custom_call.1} parent=1 // pred_fallthru
      _
    %395 = vsyncpa [#allocation4], 1
    %396 = vsyncpa [#allocation5], 1

</llo_original>
